<compile_context>
chip_gen: v5e
topology: v5e:2x2
jax: 0.10.0
libtpu: 0.0.40
codegen_flags: <defaults>
</compile_context>

<pallas_src>
import functools
import math

import numpy as np
import jax
import jax.numpy as jnp
from jax.experimental import pallas as pl
from jax.experimental.pallas import tpu as pltpu


def timestep_embedder_kernel(t_ref, fc_ref, ph_ref, w1_ref, b1_ref, w2_ref,
                             b2_ref, out_ref):
    # t_ref:   (tm, 1)    f32       scalar timesteps (row tile)
    # fc_ref:  (1, dim)   f32       concatenated freq table [freqs, freqs]
    # ph_ref:  (1, dim)   f32       phase table [0,...,0, -pi/2,...,-pi/2]
    # w1_ref:  (dim, H)   bf16/f32  Linear1 weight (transposed to (in, out))
    # b1_ref:  (1, H)     f32
    # w2_ref:  (H, H)     bf16/f32  Linear2 weight (transposed)
    # b2_ref:  (1, H)     f32
    # out_ref: (tm, H)
    wdt = w1_ref.dtype

    # concat([cos(t*f), sin(t*f)]) == cos(t*[f, f] + [0, -pi/2]):
    # one EUP cos pass over (tm, dim), one full-K MXU push (no concat, no split-K).
    args = t_ref[...] * fc_ref[...] + ph_ref[...]            # (tm, dim) f32
    emb = jnp.cos(args)

    h = jnp.dot(emb.astype(wdt), w1_ref[...],
                preferred_element_type=jnp.float32)
    h = h + b1_ref[...]                                       # (tm, H) f32

    # SiLU in the weight dtype (bf16 on bf16 weights -> bf16 EUP sigmoid on v6e/v7x,
    # and the product feeds the second dot with no extra cast pass).
    hc = h.astype(w2_ref.dtype)
    hs = hc * jax.nn.sigmoid(hc)

    o = jnp.dot(hs, w2_ref[...], preferred_element_type=jnp.float32)
    o = o + b2_ref[...]
    out_ref[...] = o.astype(out_ref.dtype)


@functools.lru_cache(maxsize=None)
def _freq_phase_tables(dim, max_period):
    """Host-side constant tables (numpy): no per-call XLA ops on the launch path."""
    half = dim // 2
    k = np.arange(half, dtype=np.float32)
    freqs = np.exp(-math.log(max_period) * k / half).astype(np.float32)
    freqs_cat = np.concatenate([freqs, freqs]).reshape(1, dim)
    phase = np.concatenate(
        [np.zeros((half,), np.float32),
         np.full((half,), -np.pi / 2.0, np.float32)]).reshape(1, dim)
    return jnp.asarray(freqs_cat), jnp.asarray(phase)


def _round_up(x, m):
    return ((x + m - 1) // m) * m


def timestep_embedder(t, w1_t, b1, w2_t, b2, frequency_embedding_size=256,
                      max_period=10000, block_n=2048, out_dtype=jnp.float32):
    """t: (N,) float timesteps.  w1_t/w2_t: (in, out) weights in their native dtype
    (bf16 recommended).  Returns (N, hidden) embeddings in `out_dtype`
    (pass jnp.bfloat16 when downstream accepts it: the kernel is output-writeback bound
    at large N, so f32 out is the bandwidth cost driver)."""
    n = t.shape[0]
    dim = frequency_embedding_size
    hidden = w1_t.shape[1]
    assert dim % 2 == 0, "odd frequency_embedding_size not supported"
    # TODO(synk): dim % 2 == 1 zero-pad column not implemented (module default 256 is even).

    freqs_cat, phase = _freq_phase_tables(dim, max_period)

    t2d = t.astype(jnp.float32).reshape(n, 1)
    b1_2d = b1.reshape(1, hidden).astype(jnp.float32)
    b2_2d = b2.reshape(1, hidden).astype(jnp.float32)

    # --- batch tiling ---------------------------------------------------------------
    # Keep the double-buffered output tile comfortably inside default scoped VMEM.
    out_row_bytes = hidden * jnp.dtype(out_dtype).itemsize
    vmem_row_cap = max(8, (16 * 1024 * 1024) // (2 * out_row_bytes))
    row_cap = max(8, min(block_n, (vmem_row_cap // 8) * 8))
    if n <= 256:
        # Tiny batches are pure fixed-overhead: a single grid step.
        tm = n
    else:
        # >= 2 grid steps so the "parallel" axis spans both TensorCores on v7x, while
        # large tiles (up to block_n rows) amortize the ~0.35 us/step grid overhead.
        tm = min(row_cap, _round_up(pl.cdiv(n, 2), 8))
    grid = (pl.cdiv(n, tm),)

    grid_spec = pltpu.PrefetchScalarGridSpec(
        num_scalar_prefetch=0,
        grid=grid,
        in_specs=[
            pl.BlockSpec((tm, 1), lambda i: (i, 0)),            # t rows
            pl.BlockSpec((1, dim), lambda i: (0, 0)),           # freqs_cat (resident)
            pl.BlockSpec((1, dim), lambda i: (0, 0)),           # phase     (resident)
            pl.BlockSpec((dim, hidden), lambda i: (0, 0)),      # W1        (resident)
            pl.BlockSpec((1, hidden), lambda i: (0, 0)),        # b1        (resident)
            pl.BlockSpec((hidden, hidden), lambda i: (0, 0)),   # W2        (resident)
            pl.BlockSpec((1, hidden), lambda i: (0, 0)),        # b2        (resident)
        ],
        out_specs=pl.BlockSpec((tm, hidden), lambda i: (i, 0)),
    )
    # TODO(synk): at production DiT hidden sizes, mark the resident weight specs with
    # pipeline_mode=pl.Buffered(1) to drop their double-buffer VMEM allocation.

    return pl.pallas_call(
        timestep_embedder_kernel,
        out_shape=jax.ShapeDtypeStruct((n, hidden), out_dtype),
        grid_spec=grid_spec,
        compiler_params=pltpu.CompilerParams(
            dimension_semantics=("parallel",),        # megacore sharding on v7x
            vmem_limit_bytes=32 * 1024 * 1024,
        ),
    )(t2d, freqs_cat, phase, w1_t, b1_2d, w2_t, b2_2d)


def _reference(t, w1_t, b1, w2_t, b2, dim=256, max_period=10000):
    """Pure-JAX reference mirroring the kernel's dtype policy (bf16 matmul operands,
    bf16 SiLU when weights are bf16, f32 accumulation), matching the PyTorch math."""
    half = dim // 2
    freqs = jnp.exp(-math.log(max_period) * jnp.arange(half, dtype=jnp.float32) / half)
    args = t.astype(jnp.float32)[:, None] * freqs[None]
    emb = jnp.concatenate([jnp.cos(args), jnp.sin(args)], axis=-1)
    h = jnp.dot(emb.astype(w1_t.dtype), w1_t,
                preferred_element_type=jnp.float32) + b1.astype(jnp.float32)
    hc = h.astype(w2_t.dtype)
    hs = hc * jax.nn.sigmoid(hc)
    o = jnp.dot(hs, w2_t,
                preferred_element_type=jnp.float32) + b2.astype(jnp.float32)
    return o


if __name__ == "__main__":
    FREQ_DIM = 256          # frequency_embedding_size (module default)
    HIDDEN = 128            # hidden_size (lane-dense: multiple of 128)

    key = jax.random.PRNGKey(0)
    k_t, k_w1, k_b1, k_w2, k_b2, k_t2 = jax.random.split(key, 6)

    # Parameters pre-transposed to (in, out); weights kept in bf16 (native inference dtype).
    w1_t = (jax.random.normal(k_w1, (FREQ_DIM, HIDDEN), jnp.float32) * 0.02).astype(jnp.bfloat16)
    b1 = jax.random.normal(k_b1, (HIDDEN,), jnp.float32) * 0.02
    w2_t = (jax.random.normal(k_w2, (HIDDEN, HIDDEN), jnp.float32) * 0.02).astype(jnp.bfloat16)
    b2 = jax.random.normal(k_b2, (HIDDEN,), jnp.float32) * 0.02

    # Small batch: single grid step.
    N = 8
    t = jax.random.uniform(k_t, (N,), jnp.float32, minval=0.0, maxval=1000.0)
    out = jax.block_until_ready(timestep_embedder(t, w1_t, b1, w2_t, b2, FREQ_DIM))
    ref = _reference(t, w1_t, b1, w2_t, b2, FREQ_DIM)
    assert out.shape == (N, HIDDEN), out.shape
    assert jnp.allclose(out, ref, atol=1e-2, rtol=1e-2), float(jnp.max(jnp.abs(out - ref)))

    # Larger batch: exercises the multi-step tiled path (2 grid steps, padded last tile).
    N2 = 600
    t2 = jax.random.uniform(k_t2, (N2,), jnp.float32, minval=0.0, maxval=1000.0)
    out2 = jax.block_until_ready(timestep_embedder(t2, w1_t, b1, w2_t, b2, FREQ_DIM))
    ref2 = _reference(t2, w1_t, b1, w2_t, b2, FREQ_DIM)
    assert out2.shape == (N2, HIDDEN), out2.shape
    assert jnp.allclose(out2, ref2, atol=1e-2, rtol=1e-2), float(jnp.max(jnp.abs(out2 - ref2)))

    print("KERNEL_OK")
</pallas_src>

<mosaic_0001>
module attributes {stable_mosaic.version = 11 : i64} {
  func.func @timestep_embedder_kernel(%arg0: i32, %arg1: memref<8x1xf32, #tpu.memory_space<vmem>>, %arg2: memref<1x256xf32, #tpu.memory_space<vmem>>, %arg3: memref<1x256xf32, #tpu.memory_space<vmem>>, %arg4: memref<256x128xbf16, #tpu.memory_space<vmem>>, %arg5: memref<1x128xf32, #tpu.memory_space<vmem>>, %arg6: memref<128x128xbf16, #tpu.memory_space<vmem>>, %arg7: memref<1x128xf32, #tpu.memory_space<vmem>>, %arg8: memref<8x128xf32, #tpu.memory_space<vmem>>) attributes {dimension_semantics = [#tpu.dimension_semantics<parallel>], iteration_bounds = array<i64: 1>, scalar_prefetch = 0 : i64, scratch_operands = 0 : i64, tpu.core_type = #tpu.core_type<tc>, window_params = [{transform_indices = @transform_0, window_bounds = array<i64: 8, 1>}, {pipeline_mode = #tpu.pipeline_mode<synchronous>, transform_indices = @transform_1, window_bounds = array<i64: 1, 256>}, {pipeline_mode = #tpu.pipeline_mode<synchronous>, transform_indices = @transform_2, window_bounds = array<i64: 1, 256>}, {pipeline_mode = #tpu.pipeline_mode<synchronous>, transform_indices = @transform_3, window_bounds = array<i64: 256, 128>}, {pipeline_mode = #tpu.pipeline_mode<synchronous>, transform_indices = @transform_4, window_bounds = array<i64: 1, 128>}, {pipeline_mode = #tpu.pipeline_mode<synchronous>, transform_indices = @transform_5, window_bounds = array<i64: 128, 128>}, {pipeline_mode = #tpu.pipeline_mode<synchronous>, transform_indices = @transform_6, window_bounds = array<i64: 1, 128>}, {transform_indices = @transform_7, window_bounds = array<i64: 8, 128>}]} {
    %c0 = arith.constant 0 : index
    %c0_0 = arith.constant 0 : index
    %0 = vector.load %arg1[%c0, %c0_0] : memref<8x1xf32, #tpu.memory_space<vmem>>, vector<8x1xf32>
    %c0_1 = arith.constant 0 : index
    %c0_2 = arith.constant 0 : index
    %1 = vector.load %arg2[%c0_1, %c0_2] : memref<1x256xf32, #tpu.memory_space<vmem>>, vector<1x256xf32>
    %2 = vector.broadcast %0 : vector<8x1xf32> to vector<8x256xf32>
    %3 = vector.broadcast %1 : vector<1x256xf32> to vector<8x256xf32>
    %4 = arith.mulf %2, %3 : vector<8x256xf32>
    %c0_3 = arith.constant 0 : index
    %c0_4 = arith.constant 0 : index
    %5 = vector.load %arg3[%c0_3, %c0_4] : memref<1x256xf32, #tpu.memory_space<vmem>>, vector<1x256xf32>
    %6 = vector.broadcast %5 : vector<1x256xf32> to vector<8x256xf32>
    %7 = arith.addf %4, %6 : vector<8x256xf32>
    %8 = math.cos %7 : vector<8x256xf32>
    %9 = arith.truncf %8 : vector<8x256xf32> to vector<8x256xbf16>
    %c0_5 = arith.constant 0 : index
    %c0_6 = arith.constant 0 : index
    %10 = vector.load %arg4[%c0_5, %c0_6] : memref<256x128xbf16, #tpu.memory_space<vmem>>, vector<256x128xbf16>
    %cst = arith.constant dense<0.000000e+00> : vector<8x128xf32>
    %11 = tpu.matmul %9, %10, %cst {dimension_numbers = #tpu.dot_dimension_numbers<[1], [0], [0], [1], [0, 0, 1, 1], [], []>} : vector<8x256xbf16>, vector<256x128xbf16>, vector<8x128xf32> -> vector<8x128xf32>
    %c0_7 = arith.constant 0 : index
    %c0_8 = arith.constant 0 : index
    %12 = vector.load %arg5[%c0_7, %c0_8] : memref<1x128xf32, #tpu.memory_space<vmem>>, vector<1x128xf32>
    %13 = vector.broadcast %12 : vector<1x128xf32> to vector<8x128xf32>
    %14 = arith.addf %11, %13 : vector<8x128xf32>
    %15 = arith.truncf %14 : vector<8x128xf32> to vector<8x128xbf16>
    %16 = arith.negf %15 : vector<8x128xbf16>
    %17 = math.exp %16 : vector<8x128xbf16>
    %cst_9 = arith.constant 1.000000e+00 : bf16
    %18 = vector.broadcast %cst_9 : bf16 to vector<8x128xbf16>
    %19 = arith.addf %18, %17 : vector<8x128xbf16>
    %20 = arith.divf %18, %19 : vector<8x128xbf16>
    %21 = arith.mulf %15, %20 : vector<8x128xbf16>
    %c0_10 = arith.constant 0 : index
    %c0_11 = arith.constant 0 : index
    %22 = vector.load %arg6[%c0_10, %c0_11] : memref<128x128xbf16, #tpu.memory_space<vmem>>, vector<128x128xbf16>
    %cst_12 = arith.constant dense<0.000000e+00> : vector<8x128xf32>
    %23 = tpu.matmul %21, %22, %cst_12 {dimension_numbers = #tpu.dot_dimension_numbers<[1], [0], [0], [1], [0, 0, 1, 1], [], []>} : vector<8x128xbf16>, vector<128x128xbf16>, vector<8x128xf32> -> vector<8x128xf32>
    %c0_13 = arith.constant 0 : index
    %c0_14 = arith.constant 0 : index
    %24 = vector.load %arg7[%c0_13, %c0_14] : memref<1x128xf32, #tpu.memory_space<vmem>>, vector<1x128xf32>
    %25 = vector.broadcast %24 : vector<1x128xf32> to vector<8x128xf32>
    %26 = arith.addf %23, %25 : vector<8x128xf32>
    %c0_15 = arith.constant 0 : index
    %c0_16 = arith.constant 0 : index
    %27 = vector.load %arg8[%c0_15, %c0_16] : memref<8x128xf32, #tpu.memory_space<vmem>>, vector<8x128xf32>
    tpu.vector_store %arg8[%c0_15, %c0_16], %26 {strides = array<i32>} : memref<8x128xf32, #tpu.memory_space<vmem>>, vector<8x128xf32>,
    return
  }
  func.func @transform_0(%arg0: i32) -> (i32, i32) {
    %c0_i32 = arith.constant 0 : i32
    %c0_i32_0 = arith.constant 0 : i32
    return %arg0, %c0_i32 : i32, i32
  }
  func.func @transform_1(%arg0: i32) -> (i32, i32) {
    %c0_i32 = arith.constant 0 : i32
    %c0_i32_0 = arith.constant 0 : i32
    %c0_i32_1 = arith.constant 0 : i32
    return %c0_i32, %c0_i32_0 : i32, i32
  }
  func.func @transform_2(%arg0: i32) -> (i32, i32) {
    %c0_i32 = arith.constant 0 : i32
    %c0_i32_0 = arith.constant 0 : i32
    %c0_i32_1 = arith.constant 0 : i32
    return %c0_i32, %c0_i32_0 : i32, i32
  }
  func.func @transform_3(%arg0: i32) -> (i32, i32) {
    %c0_i32 = arith.constant 0 : i32
    %c0_i32_0 = arith.constant 0 : i32
    %c0_i32_1 = arith.constant 0 : i32
    return %c0_i32, %c0_i32_0 : i32, i32
  }
  func.func @transform_4(%arg0: i32) -> (i32, i32) {
    %c0_i32 = arith.constant 0 : i32
    %c0_i32_0 = arith.constant 0 : i32
    %c0_i32_1 = arith.constant 0 : i32
    return %c0_i32, %c0_i32_0 : i32, i32
  }
  func.func @transform_5(%arg0: i32) -> (i32, i32) {
    %c0_i32 = arith.constant 0 : i32
    %c0_i32_0 = arith.constant 0 : i32
    %c0_i32_1 = arith.constant 0 : i32
    return %c0_i32, %c0_i32_0 : i32, i32
  }
  func.func @transform_6(%arg0: i32) -> (i32, i32) {
    %c0_i32 = arith.constant 0 : i32
    %c0_i32_0 = arith.constant 0 : i32
    %c0_i32_1 = arith.constant 0 : i32
    return %c0_i32, %c0_i32_0 : i32, i32
  }
  func.func @transform_7(%arg0: i32) -> (i32, i32) {
    %c0_i32 = arith.constant 0 : i32
    %c0_i32_0 = arith.constant 0 : i32
    return %arg0, %c0_i32 : i32, i32
  }
}

</mosaic_0001>

<llo_original>
// kernel: tpu_custom_call.1
$region0: #{tpu_custom_call.1}
  #allocation0 [shape = 'u32[]', space=smem, size = 0x4, offset = 0x4, fixed_abs, tag = 'smem constant byte address 0x4 - core index']
  #allocation1 [shape = 'u32[72,128]{1,0:T(1,128)}', space=vmem, size = 0x9000, scoped, tag = 'internal scratch']
  %s0 = inlined_call_operand.vmem [shape: f32[8,1], index: 0, kind: input, shape index: {}]
  %s1 = inlined_call_operand.vmem [shape: f32[1,256], index: 1, kind: input, shape index: {}]
  %s2 = inlined_call_operand.vmem [shape: f32[1,256], index: 2, kind: input, shape index: {}]
  %s3 = inlined_call_operand.hbm [shape: bf16[256,128], index: 3, kind: input, shape index: {}]
  %s4 = inlined_call_operand.vmem [shape: f32[1,128], index: 4, kind: input, shape index: {}]
  %s5 = inlined_call_operand.hbm [shape: bf16[128,128], index: 5, kind: input, shape index: {}]
  %s6 = inlined_call_operand.vmem [shape: f32[1,128], index: 6, kind: input, shape index: {}]
  %s7 = inlined_call_operand.hbm [shape: f32[8,128], index: 7, kind: output, shape index: {}]
  %s8 = sld [smem:[#allocation0]]
  $region46: #{tpu_custom_call.1} parent=0
    _
  %s10 = ssub.s32 1, %s8
  %s11 = scalar_select 0, %s10, %s8
  $region1: #{tpu_custom_call.1} parent=0
    #allocation2 [shape = 'u8[65536]{0}', space=vmem, size = 0x10000, scoped, tag = 'input window, operand 3, single buffered']
    #allocation3 [shape = 's32[1]{0}', space=sflag, size = 0x4, scoped, tag = 'scoped memory for tpu_custom_call.1']
    #allocation4 [shape = 's32[1]{0}', space=sflag, size = 0x4, scoped, tag = 'scoped memory for tpu_custom_call.1']
    #allocation5 [shape = 'u8[32768]{0}', space=vmem, size = 0x8000, scoped, tag = 'input window, operand 5, single buffered']
    #allocation6 [shape = 's32[1]{0}', space=sflag, size = 0x4, scoped, tag = 'scoped memory for tpu_custom_call.1']
    #allocation7 [shape = 'u8[4096]{0}', space=vmem, size = 0x1000, scoped, tag = 'output window, operand 0, single buffered']
    %12 = vsyncpa [#allocation3], 0
    %13 = vsyncpa [#allocation6], 0
    %14 = vsyncpa [#allocation4], 0
    // Predicated region
    $region2: #{tpu_custom_call.1} parent=1 // pred_check
      _
    $region3: #{tpu_custom_call.1} parent=1 // pred_check_branch
      %16 = sbr.rel (0) target = $region5
    $region4: #{tpu_custom_call.1} parent=1 // pred_region
      _
    $region5: #{tpu_custom_call.1} parent=1 // pred_fallthru
      _
    // Predicated region
    $region6: #{tpu_custom_call.1} parent=1 // pred_check
      _
    $region7: #{tpu_custom_call.1} parent=1 // pred_check_branch
      %18 = sbr.rel (0) target = $region9
    $region8: #{tpu_custom_call.1} parent=1 // pred_region
      _
    $region9: #{tpu_custom_call.1} parent=1 // pred_fallthru
      _
    // Predicated region
    $region10: #{tpu_custom_call.1} parent=1 // pred_check
      _
    $region11: #{tpu_custom_call.1} parent=1 // pred_check_branch
      %20 = sbr.rel (0) target = $region13
    $region12: #{tpu_custom_call.1} parent=1 // pred_region
      _
    $region13: #{tpu_custom_call.1} parent=1 // pred_fallthru
      _
    // Predicated region
    $region14: #{tpu_custom_call.1} parent=1 // pred_check
      _
    $region15: #{tpu_custom_call.1} parent=1 // pred_check_branch
      %22 = sbr.rel (0) target = $region17
    $region16: #{tpu_custom_call.1} parent=1 // pred_region
      %24 = vsyncadd [#allocation3], 0
      %s25 = sshll.u32 %s3, 4
      %s26 = int_to_ptr.hbm [resolvable:$true] %s25
      %s27 = sshll.u32 [#allocation2], 4
      %s28 = int_to_ptr.vmem [resolvable:$true] %s27
      %33 = dma.hbm_to_vmem [thread:$0]  %s26, 2048, %s28, [#allocation3], 64, 64, 4
    $region17: #{tpu_custom_call.1} parent=1 // pred_fallthru
      _
    // Predicated region
    $region18: #{tpu_custom_call.1} parent=1 // pred_check
      _
    $region19: #{tpu_custom_call.1} parent=1 // pred_check_branch
      %35 = sbr.rel (0) target = $region21
    $region20: #{tpu_custom_call.1} parent=1 // pred_region
      _
    $region21: #{tpu_custom_call.1} parent=1 // pred_fallthru
      _
    // Predicated region
    $region22: #{tpu_custom_call.1} parent=1 // pred_check
      _
    $region23: #{tpu_custom_call.1} parent=1 // pred_check_branch
      %37 = sbr.rel (0) target = $region25
    $region24: #{tpu_custom_call.1} parent=1 // pred_region
      %39 = vsyncadd [#allocation6], 0
      %s40 = sshll.u32 %s5, 4
      %s41 = int_to_ptr.hbm [resolvable:$true] %s40
      %s42 = sshll.u32 [#allocation5], 4
      %s43 = int_to_ptr.vmem [resolvable:$true] %s42
      %48 = dma.hbm_to_vmem [thread:$0]  %s41, 1024, %s43, [#allocation6], 64, 64, 4
    $region25: #{tpu_custom_call.1} parent=1 // pred_fallthru
      _
    // Predicated region
    $region26: #{tpu_custom_call.1} parent=1 // pred_check
      _
    $region27: #{tpu_custom_call.1} parent=1 // pred_check_branch
      %50 = sbr.rel (0) target = $region29
    $region28: #{tpu_custom_call.1} parent=1 // pred_region
      _
    $region29: #{tpu_custom_call.1} parent=1 // pred_fallthru
      _
    // Predicated region
    $region30: #{tpu_custom_call.1} parent=1 // pred_check
      _
    $region31: #{tpu_custom_call.1} parent=1 // pred_check_branch
      %52 = sbr.rel (0) target = $region33
    $region32: #{tpu_custom_call.1} parent=1 // pred_region
      %54 = dma.done [#allocation3], 2048
    $region33: #{tpu_custom_call.1} parent=1 // pred_fallthru
      _
    // Predicated region
    $region34: #{tpu_custom_call.1} parent=1 // pred_check
      _
    $region35: #{tpu_custom_call.1} parent=1 // pred_check_branch
      %56 = sbr.rel (0) target = $region37
    $region36: #{tpu_custom_call.1} parent=1 // pred_region
      %58 = dma.done [#allocation6], 1024
    $region37: #{tpu_custom_call.1} parent=1 // pred_fallthru
      _
    %v60 = vld [vmem:[%s0] sm:$0xff]
    %v61 = vld [vmem:[%s1] sm:$0x3]
    %63 = vset.pattern.permute.xlu0 0
    %64 = vperm.xlu0 %63, %v60
    %v65 = vpop.permute.xlu0 %64
    %v68 = vperm.slane %v61, 0
    %v69 = vperm.slane %v61, 1
    %v72 = vmul.f32 %v65, %v68
    %v73 = vmul.f32 %v65, %v69
    %v74 = vld [vmem:[%s2] sm:$0x3]
    %v76 = vperm.slane %v74, 0
    %v77 = vperm.slane %v74, 1
    %v80 = vadd.f32 %v72, %v76
    %v81 = vadd.f32 %v73, %v77
    %v82 = vand.u32 2147483647, %v80
    %vm83 = vcmp.le.f32.partialorder %v82, 0.7853982
    %vm84 = vcmp.lt.s32.totalorder %v80, 0
    %v85 = vand.u32 %v80, 2139095040
    %v86 = vshrl.u32 %v85, 23
    %v87 = vsub.s32 %v86, 127
    %v88 = vand.u32 2147483647, %v80
    %v89 = vand.u32 %v88, 8388607
    %v90 = vor.u32 %v89, 8388608
    %v91 = vsub.s32 0, %v90
    %v92 = vadd.s32 %v87, 1
    %vm93 = vcmp.gt.s32.totalorder %v92, 0
    %v94 = vsel %vm93, %v92, 0
    %v95 = vshrl.u32 %v94, 5
    %v96 = vand.u32 %v94, 31
    %v97 = vsub.s32 32, %v96
    %v98 = vshrl.u32 683565275, %v97
    %v99 = vshll.u32 683565275, %v96
    %v100 = vshrl.u32 2475754826, %v97
    %v101 = vor.u32 %v99, %v100
    %v102 = vshll.u32 2475754826, %v96
    %v103 = vshrl.u32 2131351028, %v97
    %v104 = vor.u32 %v102, %v103
    %v105 = vshll.u32 2131351028, %v96
    %v106 = vshrl.u32 2102212464, %v97
    %v107 = vor.u32 %v105, %v106
    %v108 = vshll.u32 2102212464, %v96
    %v109 = vshrl.u32 920167782, %v97
    %v110 = vor.u32 %v108, %v109
    %v111 = vshll.u32 920167782, %v96
    %v112 = vshrl.u32 1326507024, %v97
    %v113 = vor.u32 %v111, %v112
    %vm114 = vcmp.lt.s32.totalorder %v95, 1
    %vm115 = vcmp.lt.s32.totalorder %v95, 2
    %vm116 = vcmp.lt.s32.totalorder %v95, 3
    %vm117 = vcmp.lt.s32.totalorder %v95, 4
    %v118 = vsel %vm114, %v98, %v101
    %v119 = vsel %vm117, %v107, 2102212464
    %v120 = vsel %vm116, %v104, %v119
    %v121 = vsel %vm115, %v118, %v120
    %v122 = vsel %vm114, %v101, %v104
    %v123 = vsel %vm117, %v110, 920167782
    %v124 = vsel %vm116, %v107, %v123
    %v125 = vsel %vm115, %v122, %v124
    %v126 = vsel %vm114, %v104, %v107
    %v127 = vsel %vm117, %v113, 1326507024
    %v128 = vsel %vm116, %v110, %v127
    %v129 = vsel %vm115, %v126, %v128
    %v130 = vshll.u32 %v90, 8
    %v131 = vand.u32 %v130, 65535
    %v132 = vshrl.u32 %v130, 16
    %v133 = vand.u32 %v129, 65535
    %v134 = vshrl.u32 %v129, 16
    %v135 = vmul.u32 %v131, %v133
    %v136 = vmul.u32 %v131, %v134
    %v137 = vmul.u32 %v132, %v133
    %v138 = vmul.u32 %v132, %v134
    %v139 = vshll.u32 %v136, 16
    %v140 = vshrl.u32 %v136, 16
    %v141 = vshll.u32 %v137, 16
    %v142 = vshrl.u32 %v137, 16
    %vm143 = vc.u32 %v135, %v139
    %v144 = vsel %vm143, 1, 0
    %v145 = vadd.s32 %v135, %v139
    %v146 = vadd.s32 %v138, %v144
    %vm147 = vc.u32 %v145, %v141
    %v148 = vsel %vm147, 1, 0
    %v149 = vadd.s32 %v145, %v141
    %v150 = vadd.s32 %v146, %v148
    %v151 = vadd.s32 %v150, %v140
    %v152 = vadd.s32 %v151, %v142
    %v153 = vand.u32 %v130, 65535
    %v154 = vshrl.u32 %v130, 16
    %v155 = vand.u32 %v125, 65535
    %v156 = vshrl.u32 %v125, 16
    %v157 = vmul.u32 %v153, %v155
    %v158 = vmul.u32 %v153, %v156
    %v159 = vmul.u32 %v154, %v155
    %v160 = vmul.u32 %v154, %v156
    %v161 = vshll.u32 %v158, 16
    %v162 = vshrl.u32 %v158, 16
    %v163 = vshll.u32 %v159, 16
    %v164 = vshrl.u32 %v159, 16
    %vm165 = vc.u32 %v157, %v161
    %v166 = vsel %vm165, 1, 0
    %v167 = vadd.s32 %v157, %v161
    %v168 = vadd.s32 %v160, %v166
    %vm169 = vc.u32 %v167, %v163
    %v170 = vsel %vm169, 1, 0
    %v171 = vadd.s32 %v167, %v163
    %v172 = vadd.s32 %v168, %v170
    %v173 = vadd.s32 %v172, %v162
    %v174 = vadd.s32 %v173, %v164
    %v175 = vmul.u32 %v130, %v121
    %v176 = vadd.s32 %v152, %v171
    %vm177 = vc.u32 %v152, %v171
    %v178 = vadd.s32 %v174, 1
    %v179 = vsel %vm177, %v178, %v174
    %v180 = vadd.s32 %v175, %v179
    %v181 = vadd.s32 %v180, 536870912
    %v182 = vshrl.u32 %v181, 30
    %v183 = vshll.u32 %v182, 30
    %v184 = vsub.s32 %v180, %v183
    %vm185 = vcmp.lt.s32.totalorder %v184, 0
    %v186 = vsub.s32 0, %v184
    %v187 = vsel %vm185, %v186, %v184
    %v188 = vclz %v187
    %v189 = vsub.s32 %v188, 2
    %vm190 = vcmp.gt.s32.totalorder 0, %v189
    %v191 = vsel %vm190, 0, %v189
    %v192 = vsub.s32 32, %v191
    %v193 = vshll.u32 %v184, %v191
    %v194 = vshrl.u32 %v176, %v192
    %v195 = vor.u32 %v193, %v194
    %v196 = vsub.s32 4294967266, %v191
    %v197 = vadd.s32 %v196, 127
    %v198 = vshll.u32 %v197, 23
    %v199 = vor.u32 4788187, %v198
    %v200 = vand.u32 2147483647, %v199
    %v202 = vcvt.s32.f32 %v195
    %v203 = vmul.f32 %v202, %v200
    %v204 = vxor.u32 %v203, 2147483648
    %v205 = vsel %vm84, %v204, %v203
    %v206 = vsub.s32 4, %v182
    %v207 = vsel %vm84, %v206, %v182
    %v208 = vsel %vm83, %v80, %v205
    %v209 = vsel %vm83, 0, %v207
    %v210 = vmul.f32 %v208, %v208
    %v211 = vmul.f32 %v210, -0.001358992
    %v212 = vadd.f32 %v211, 0.041655596
    %v213 = vmul.f32 %v210, %v212
    %v214 = vadd.f32 %v213, -0.4999988
    %v215 = vmul.f32 %v210, %v214
    %v216 = vadd.f32 1.0, %v215
    %v217 = vmul.f32 %v208, %v208
    %v218 = vmul.f32 %v217, -0.00019511016
    %v219 = vadd.f32 %v218, 0.008332121
    %v220 = vmul.f32 %v217, %v219
    %v221 = vadd.f32 %v220, -0.16666654
    %v222 = vmul.f32 %v217, %v221
    %v223 = vadd.f32 %v222, 1.0
    %v224 = vmul.f32 %v223, %v208
    %vm225 = vweird.f32 %v80
    %v226 = vand.u32 %v209, 3
    %vm227 = vcmp.lt.s32.totalorder %v226, 2
    %vm228 = vcmp.eq.s32.totalorder %v226, 0
    %v229 = vxor.u32 %v224, 2147483648
    %v230 = vsel %vm228, %v216, %v229
    %vm231 = vcmp.eq.s32.totalorder %v226, 2
    %v232 = vxor.u32 %v216, 2147483648
    %v233 = vsel %vm231, %v232, %v224
    %v234 = vsel %vm227, %v230, %v233
    %v235 = vsel %vm225, nan, %v234
    %v236 = vand.u32 2147483647, %v81
    %vm237 = vcmp.le.f32.partialorder %v236, 0.7853982
    %vm238 = vcmp.lt.s32.totalorder %v81, 0
    %v239 = vand.u32 %v81, 2139095040
    %v240 = vshrl.u32 %v239, 23
    %v241 = vsub.s32 %v240, 127
    %v242 = vand.u32 2147483647, %v81
    %v243 = vand.u32 %v242, 8388607
    %v244 = vor.u32 %v243, 8388608
    %v245 = vsub.s32 0, %v244
    %v246 = vadd.s32 %v241, 1
    %vm247 = vcmp.gt.s32.totalorder %v246, 0
    %v248 = vsel %vm247, %v246, 0
    %v249 = vshrl.u32 %v248, 5
    %v250 = vand.u32 %v248, 31
    %v251 = vsub.s32 32, %v250
    %v252 = vshrl.u32 683565275, %v251
    %v253 = vshll.u32 683565275, %v250
    %v254 = vshrl.u32 2475754826, %v251
    %v255 = vor.u32 %v253, %v254
    %v256 = vshll.u32 2475754826, %v250
    %v257 = vshrl.u32 2131351028, %v251
    %v258 = vor.u32 %v256, %v257
    %v259 = vshll.u32 2131351028, %v250
    %v260 = vshrl.u32 2102212464, %v251
    %v261 = vor.u32 %v259, %v260
    %v262 = vshll.u32 2102212464, %v250
    %v263 = vshrl.u32 920167782, %v251
    %v264 = vor.u32 %v262, %v263
    %v265 = vshll.u32 920167782, %v250
    %v266 = vshrl.u32 1326507024, %v251
    %v267 = vor.u32 %v265, %v266
    %vm268 = vcmp.lt.s32.totalorder %v249, 1
    %vm269 = vcmp.lt.s32.totalorder %v249, 2
    %vm270 = vcmp.lt.s32.totalorder %v249, 3
    %vm271 = vcmp.lt.s32.totalorder %v249, 4
    %v272 = vsel %vm268, %v252, %v255
    %v273 = vsel %vm271, %v261, 2102212464
    %v274 = vsel %vm270, %v258, %v273
    %v275 = vsel %vm269, %v272, %v274
    %v276 = vsel %vm268, %v255, %v258
    %v277 = vsel %vm271, %v264, 920167782
    %v278 = vsel %vm270, %v261, %v277
    %v279 = vsel %vm269, %v276, %v278
    %v280 = vsel %vm268, %v258, %v261
    %v281 = vsel %vm271, %v267, 1326507024
    %v282 = vsel %vm270, %v264, %v281
    %v283 = vsel %vm269, %v280, %v282
    %v284 = vshll.u32 %v244, 8
    %v285 = vand.u32 %v284, 65535
    %v286 = vshrl.u32 %v284, 16
    %v287 = vand.u32 %v283, 65535
    %v288 = vshrl.u32 %v283, 16
    %v289 = vmul.u32 %v285, %v287
    %v290 = vmul.u32 %v285, %v288
    %v291 = vmul.u32 %v286, %v287
    %v292 = vmul.u32 %v286, %v288
    %v293 = vshll.u32 %v290, 16
    %v294 = vshrl.u32 %v290, 16
    %v295 = vshll.u32 %v291, 16
    %v296 = vshrl.u32 %v291, 16
    %vm297 = vc.u32 %v289, %v293
    %v298 = vsel %vm297, 1, 0
    %v299 = vadd.s32 %v289, %v293
    %v300 = vadd.s32 %v292, %v298
    %vm301 = vc.u32 %v299, %v295
    %v302 = vsel %vm301, 1, 0
    %v303 = vadd.s32 %v299, %v295
    %v304 = vadd.s32 %v300, %v302
    %v305 = vadd.s32 %v304, %v294
    %v306 = vadd.s32 %v305, %v296
    %v307 = vand.u32 %v284, 65535
    %v308 = vshrl.u32 %v284, 16
    %v309 = vand.u32 %v279, 65535
    %v310 = vshrl.u32 %v279, 16
    %v311 = vmul.u32 %v307, %v309
    %v312 = vmul.u32 %v307, %v310
    %v313 = vmul.u32 %v308, %v309
    %v314 = vmul.u32 %v308, %v310
    %v315 = vshll.u32 %v312, 16
    %v316 = vshrl.u32 %v312, 16
    %v317 = vshll.u32 %v313, 16
    %v318 = vshrl.u32 %v313, 16
    %vm319 = vc.u32 %v311, %v315
    %v320 = vsel %vm319, 1, 0
    %v321 = vadd.s32 %v311, %v315
    %v322 = vadd.s32 %v314, %v320
    %vm323 = vc.u32 %v321, %v317
    %v324 = vsel %vm323, 1, 0
    %v325 = vadd.s32 %v321, %v317
    %v326 = vadd.s32 %v322, %v324
    %v327 = vadd.s32 %v326, %v316
    %v328 = vadd.s32 %v327, %v318
    %v329 = vmul.u32 %v284, %v275
    %v330 = vadd.s32 %v306, %v325
    %vm331 = vc.u32 %v306, %v325
    %v332 = vadd.s32 %v328, 1
    %v333 = vsel %vm331, %v332, %v328
    %v334 = vadd.s32 %v329, %v333
    %v335 = vadd.s32 %v334, 536870912
    %v336 = vshrl.u32 %v335, 30
    %v337 = vshll.u32 %v336, 30
    %v338 = vsub.s32 %v334, %v337
    %vm339 = vcmp.lt.s32.totalorder %v338, 0
    %v340 = vsub.s32 0, %v338
    %v341 = vsel %vm339, %v340, %v338
    %v342 = vclz %v341
    %v343 = vsub.s32 %v342, 2
    %vm344 = vcmp.gt.s32.totalorder 0, %v343
    %v345 = vsel %vm344, 0, %v343
    %v346 = vsub.s32 32, %v345
    %v347 = vshll.u32 %v338, %v345
    %v348 = vshrl.u32 %v330, %v346
    %v349 = vor.u32 %v347, %v348
    %v350 = vsub.s32 4294967266, %v345
    %v351 = vadd.s32 %v350, 127
    %v352 = vshll.u32 %v351, 23
    %v353 = vor.u32 4788187, %v352
    %v354 = vand.u32 2147483647, %v353
    %v356 = vcvt.s32.f32 %v349
    %v357 = vmul.f32 %v356, %v354
    %v358 = vxor.u32 %v357, 2147483648
    %v359 = vsel %vm238, %v358, %v357
    %v360 = vsub.s32 4, %v336
    %v361 = vsel %vm238, %v360, %v336
    %v362 = vsel %vm237, %v81, %v359
    %v363 = vsel %vm237, 0, %v361
    %v364 = vmul.f32 %v362, %v362
    %v365 = vmul.f32 %v364, -0.001358992
    %v366 = vadd.f32 %v365, 0.041655596
    %v367 = vmul.f32 %v364, %v366
    %v368 = vadd.f32 %v367, -0.4999988
    %v369 = vmul.f32 %v364, %v368
    %v370 = vadd.f32 1.0, %v369
    %v371 = vmul.f32 %v362, %v362
    %v372 = vmul.f32 %v371, -0.00019511016
    %v373 = vadd.f32 %v372, 0.008332121
    %v374 = vmul.f32 %v371, %v373
    %v375 = vadd.f32 %v374, -0.16666654
    %v376 = vmul.f32 %v371, %v375
    %v377 = vadd.f32 %v376, 1.0
    %v378 = vmul.f32 %v377, %v362
    %vm379 = vweird.f32 %v81
    %v380 = vand.u32 %v363, 3
    %vm381 = vcmp.lt.s32.totalorder %v380, 2
    %vm382 = vcmp.eq.s32.totalorder %v380, 0
    %v383 = vxor.u32 %v378, 2147483648
    %v384 = vsel %vm382, %v370, %v383
    %vm385 = vcmp.eq.s32.totalorder %v380, 2
    %v386 = vxor.u32 %v370, 2147483648
    %v387 = vsel %vm385, %v386, %v378
    %v388 = vsel %vm381, %v384, %v387
    %v389 = vsel %vm379, nan, %v388
    %v390 = vpack.c.bf16 %v235, %v235
    %v391 = vpack.c.bf16 %v389, %v389
    %v392 = vld [vmem:[#allocation2] sm:$0xf]
    %v393 = vld [vmem:[#allocation2 + $0x4] sm:$0xf]
    %v394 = vld [vmem:[#allocation2 + $0x8] sm:$0xf]
    %v395 = vld [vmem:[#allocation2 + $0xc] sm:$0xf]
    %v396 = vld [vmem:[#allocation2 + $0x10] sm:$0xf]
    %v397 = vld [vmem:[#allocation2 + $0x14] sm:$0xf]
    %v398 = vld [vmem:[#allocation2 + $0x18] sm:$0xf]
    %v399 = vld [vmem:[#allocation2 + $0x1c] sm:$0xf]
    %v400 = vld [vmem:[#allocation2 + $0x20] sm:$0xf]
    %v401 = vld [vmem:[#allocation2 + $0x24] sm:$0xf]
    %v402 = vld [vmem:[#allocation2 + $0x28] sm:$0xf]
    %v403 = vld [vmem:[#allocation2 + $0x2c] sm:$0xf]
    %v404 = vld [vmem:[#allocation2 + $0x30] sm:$0xf]
    %v405 = vld [vmem:[#allocation2 + $0x34] sm:$0xf]
    %v406 = vld [vmem:[#allocation2 + $0x38] sm:$0xf]
    %v407 = vld [vmem:[#allocation2 + $0x3c] sm:$0xf]
    %v408 = vld [vmem:[#allocation2 + $0x40] sm:$0xf]
    %v409 = vld [vmem:[#allocation2 + $0x44] sm:$0xf]
    %v410 = vld [vmem:[#allocation2 + $0x48] sm:$0xf]
    %v411 = vld [vmem:[#allocation2 + $0x4c] sm:$0xf]
    %v412 = vld [vmem:[#allocation2 + $0x50] sm:$0xf]
    %v413 = vld [vmem:[#allocation2 + $0x54] sm:$0xf]
    %v414 = vld [vmem:[#allocation2 + $0x58] sm:$0xf]
    %v415 = vld [vmem:[#allocation2 + $0x5c] sm:$0xf]
    %v416 = vld [vmem:[#allocation2 + $0x60] sm:$0xf]
    %v417 = vld [vmem:[#allocation2 + $0x64] sm:$0xf]
    %v418 = vld [vmem:[#allocation2 + $0x68] sm:$0xf]
    %v419 = vld [vmem:[#allocation2 + $0x6c] sm:$0xf]
    %v420 = vld [vmem:[#allocation2 + $0x70] sm:$0xf]
    %v421 = vld [vmem:[#allocation2 + $0x74] sm:$0xf]
    %v422 = vld [vmem:[#allocation2 + $0x78] sm:$0xf]
    %v423 = vld [vmem:[#allocation2 + $0x7c] sm:$0xf]
    %v424 = vld [vmem:[%s4] sm:$0x1]
    %v426 = vperm.slane %v424, 0
    %v460 = vunpack.c.l.b16 %v392
    %v461 = vunpack.c.l.b16 %v393
    %v462 = vunpack.c.l.b16 %v394
    %v463 = vunpack.c.l.b16 %v395
    %v464 = vunpack.c.l.b16 %v396
    %v465 = vunpack.c.l.b16 %v397
    %v466 = vunpack.c.l.b16 %v398
    %v467 = vunpack.c.l.b16 %v399
    %v468 = vunpack.c.l.b16 %v400
    %v469 = vunpack.c.l.b16 %v401
    %v470 = vunpack.c.l.b16 %v402
    %v471 = vunpack.c.l.b16 %v403
    %v472 = vunpack.c.l.b16 %v404
    %v473 = vunpack.c.l.b16 %v405
    %v474 = vunpack.c.l.b16 %v406
    %v475 = vunpack.c.l.b16 %v407
    %v476 = vunpack.c.l.b16 %v408
    %v477 = vunpack.c.l.b16 %v409
    %v478 = vunpack.c.l.b16 %v410
    %v479 = vunpack.c.l.b16 %v411
    %v480 = vunpack.c.l.b16 %v412
    %v481 = vunpack.c.l.b16 %v413
    %v482 = vunpack.c.l.b16 %v414
    %v483 = vunpack.c.l.b16 %v415
    %v484 = vunpack.c.l.b16 %v416
    %v485 = vunpack.c.l.b16 %v417
    %v486 = vunpack.c.l.b16 %v418
    %v487 = vunpack.c.l.b16 %v419
    %v488 = vunpack.c.l.b16 %v420
    %v489 = vunpack.c.l.b16 %v421
    %v490 = vunpack.c.l.b16 %v422
    %v491 = vunpack.c.l.b16 %v423
    %v492 = vpack.c.b16 %v461, %v460
    %v493 = vpack.c.b16 %v463, %v462
    %v494 = vpack.c.b16 %v465, %v464
    %v495 = vpack.c.b16 %v467, %v466
    %v496 = vpack.c.b16 %v469, %v468
    %v497 = vpack.c.b16 %v471, %v470
    %v498 = vpack.c.b16 %v473, %v472
    %v499 = vpack.c.b16 %v475, %v474
    %v500 = vpack.c.b16 %v477, %v476
    %v501 = vpack.c.b16 %v479, %v478
    %v502 = vpack.c.b16 %v481, %v480
    %v503 = vpack.c.b16 %v483, %v482
    %v504 = vpack.c.b16 %v485, %v484
    %v505 = vpack.c.b16 %v487, %v486
    %v506 = vpack.c.b16 %v489, %v488
    %v507 = vpack.c.b16 %v491, %v490
    %524 = vmatpush.bf16.msra.mxu0 %v499
    %525 = vmatpush.bf16.msra.mxu0 %v498
    %526 = vmatpush.bf16.msra.mxu0 %v497
    %527 = vmatpush.bf16.msra.mxu0 %v496
    %528 = vmatpush.bf16.msra.mxu0 %v495
    %529 = vmatpush.bf16.msra.mxu0 %v494
    %530 = vmatpush.bf16.msra.mxu0 %v493
    %531 = vmatpush.bf16.msra.mxu0 %v492
    %532 = vmatmul.bf16.gmra.mxu0 %v390
    %v533 = vpop.f32.mrf.mxu0
    %v534 = vadd.f32 %v426, %v533
    %v535 = vpop.f32.mrf.mxu0
    %536 = vdwg.mxu0
    %537 = vmatpush.bf16.msra.mxu0 %v507
    %538 = vmatpush.bf16.msra.mxu0 %v506
    %539 = vmatpush.bf16.msra.mxu0 %v505
    %540 = vmatpush.bf16.msra.mxu0 %v504
    %541 = vmatpush.bf16.msra.mxu0 %v503
    %542 = vmatpush.bf16.msra.mxu0 %v502
    %543 = vmatpush.bf16.msra.mxu0 %v501
    %544 = vmatpush.bf16.msra.mxu0 %v500
    %545 = vmatmul.bf16.gmra.mxu0 %v391
    %v546 = vpop.f32.mrf.mxu0
    %v547 = vadd.f32 %v534, %v546
    %v548 = vpop.f32.mrf.mxu0
    %549 = vdwg.mxu0
    %v550 = vpack.c.bf16 %v547, %v547
    %v551 = vxor.u32 %v550, 2147516416
    %v552 = vunpack.c.l.bf16 %v551
    %v553 = vmul.f32 %v552, 1.442695
    %v554 = vpow.pop %v553
    %v555 = vpack.c.bf16 %v554, %v554
    %v556 = vunpack.c.l.bf16 %v555
    %v557 = vadd.f32 %v556, 1.0
    %v558 = vpack.c.bf16 %v557, %v557
    %v559 = vunpack.c.h.bf16 1065369472
    %v560 = vunpack.c.l.bf16 1065369472
    %v561 = vunpack.c.h.bf16 %v558
    %v562 = vunpack.c.l.bf16 %v558
    %v563 = vrcp.pop %v561
    %v564 = vmul.f32 %v559, %v563
    %v565 = vrcp.pop %v562
    %v566 = vmul.f32 %v560, %v565
    %v567 = vpack.c.bf16 %v564, %v566
    %v568 = vunpack.c.l.bf16 %v550
    %v569 = vunpack.c.l.bf16 %v567
    %v570 = vmul.f32 %v568, %v569
    %v571 = vpack.c.bf16 %v570, %v570
    %v572 = vld [vmem:[#allocation5] sm:$0xf]
    %v573 = vld [vmem:[#allocation5 + $0x4] sm:$0xf]
    %v574 = vld [vmem:[#allocation5 + $0x8] sm:$0xf]
    %v575 = vld [vmem:[#allocation5 + $0xc] sm:$0xf]
    %v576 = vld [vmem:[#allocation5 + $0x10] sm:$0xf]
    %v577 = vld [vmem:[#allocation5 + $0x14] sm:$0xf]
    %v578 = vld [vmem:[#allocation5 + $0x18] sm:$0xf]
    %v579 = vld [vmem:[#allocation5 + $0x1c] sm:$0xf]
    %v580 = vld [vmem:[#allocation5 + $0x20] sm:$0xf]
    %v581 = vld [vmem:[#allocation5 + $0x24] sm:$0xf]
    %v582 = vld [vmem:[#allocation5 + $0x28] sm:$0xf]
    %v583 = vld [vmem:[#allocation5 + $0x2c] sm:$0xf]
    %v584 = vld [vmem:[#allocation5 + $0x30] sm:$0xf]
    %v585 = vld [vmem:[#allocation5 + $0x34] sm:$0xf]
    %v586 = vld [vmem:[#allocation5 + $0x38] sm:$0xf]
    %v587 = vld [vmem:[#allocation5 + $0x3c] sm:$0xf]
    %v588 = vld [vmem:[%s6] sm:$0x1]
    %v590 = vperm.slane %v588, 0
    %v608 = vunpack.c.l.b16 %v572
    %v609 = vunpack.c.l.b16 %v573
    %v610 = vunpack.c.l.b16 %v574
    %v611 = vunpack.c.l.b16 %v575
    %v612 = vunpack.c.l.b16 %v576
    %v613 = vunpack.c.l.b16 %v577
    %v614 = vunpack.c.l.b16 %v578
    %v615 = vunpack.c.l.b16 %v579
    %v616 = vunpack.c.l.b16 %v580
    %v617 = vunpack.c.l.b16 %v581
    %v618 = vunpack.c.l.b16 %v582
    %v619 = vunpack.c.l.b16 %v583
    %v620 = vunpack.c.l.b16 %v584
    %v621 = vunpack.c.l.b16 %v585
    %v622 = vunpack.c.l.b16 %v586
    %v623 = vunpack.c.l.b16 %v587
    %v624 = vpack.c.b16 %v609, %v608
    %v625 = vpack.c.b16 %v611, %v610
    %v626 = vpack.c.b16 %v613, %v612
    %v627 = vpack.c.b16 %v615, %v614
    %v628 = vpack.c.b16 %v617, %v616
    %v629 = vpack.c.b16 %v619, %v618
    %v630 = vpack.c.b16 %v621, %v620
    %v631 = vpack.c.b16 %v623, %v622
    %640 = vmatpush.bf16.msra.mxu0 %v631
    %641 = vmatpush.bf16.msra.mxu0 %v630
    %642 = vmatpush.bf16.msra.mxu0 %v629
    %643 = vmatpush.bf16.msra.mxu0 %v628
    %644 = vmatpush.bf16.msra.mxu0 %v627
    %645 = vmatpush.bf16.msra.mxu0 %v626
    %646 = vmatpush.bf16.msra.mxu0 %v625
    %647 = vmatpush.bf16.msra.mxu0 %v624
    %648 = vmatmul.bf16.gmra.mxu0 %v571
    %v649 = vpop.f32.mrf.mxu0
    %v650 = vadd.f32 %v590, %v649
    %v651 = vpop.f32.mrf.mxu0
    %652 = vdwg.mxu0
    %653 = vst [vmem:[#allocation7] sm:$0xff] %v650
    // Predicated region
    $region38: #{tpu_custom_call.1} parent=1 // pred_check
      _
    $region39: #{tpu_custom_call.1} parent=1 // pred_check_branch
      %655 = sbr.rel (0) target = $region41
    $region40: #{tpu_custom_call.1} parent=1 // pred_region
      %657 = vsyncadd [#allocation4], 0
      %s659 = sshll.u32 [#allocation7], 4
      %s660 = int_to_ptr.vmem [resolvable:$true] %s659
      %s661 = sshll.u32 %s7, 4
      %s662 = int_to_ptr.hbm [resolvable:$true] %s661
      %664 = dma.vmem_to_hbm [thread:$0]  %s660, 128, %s662, [#allocation4]
    $region41: #{tpu_custom_call.1} parent=1 // pred_fallthru
      _
    // Predicated region
    $region42: #{tpu_custom_call.1} parent=1 // pred_check
      _
    $region43: #{tpu_custom_call.1} parent=1 // pred_check_branch
      %666 = sbr.rel (0) target = $region45
    $region44: #{tpu_custom_call.1} parent=1 // pred_region
      %668 = dma.done [#allocation4], 128
    $region45: #{tpu_custom_call.1} parent=1 // pred_fallthru
      _
    %669 = vsyncpa [#allocation3], 1
    %670 = vsyncpa [#allocation6], 1
    %671 = vsyncpa [#allocation4], 1

</llo_original>
